<compile_context>
chip_gen: v6e
topology: v6e:2x2x1
jax: 0.10.0
libtpu: 0.0.40
codegen_flags: <defaults>
</compile_context>

<pallas_src>
import math
from functools import partial

import jax
import jax.numpy as jnp
from jax.experimental import pallas as pl
from jax.experimental.pallas import tpu as pltpu


def _round_up(n, m):
    return ((n + m - 1) // m) * m


def _mlp_block_kernel(x_ref, w1_ref, b1_ref, w2_ref, b2_ref, o_ref, acc_ref):
    # Grid: (row tiles [parallel], mlp_dim chunks [arbitrary / reduction-like])
    # x_ref : (TM, Hp)     row tile of flattened tokens (compute dtype)
    # w1_ref: (Hp, TMLP)   dense_1 weight chunk (transposed, compute dtype)
    # b1_ref: (1, TMLP)    dense_1 bias chunk (f32)
    # w2_ref: (TMLP, Hp)   dense_2 weight chunk (transposed, compute dtype)
    # b2_ref: (1, Hp)      dense_2 bias (f32)
    # o_ref : (TM, Hp)     output row tile (resident across the mlp axis)
    # acc_ref: (TM, Hp)    f32 accumulator scratch
    j = pl.program_id(1)

    @pl.when(j == 0)
    def _():
        acc_ref[...] = jnp.zeros_like(acc_ref)

    # dense_1 chunk + bias + GELU (f32 math; padded mlp columns are inert:
    # gelu(0 + 0) = 0 and the matching W2 rows are zero).
    h = jnp.dot(x_ref[...], w1_ref[...], preferred_element_type=jnp.float32)
    h = h + b1_ref[...]
    # TODO(synk): PyTorch nn.GELU() default is the exact erf variant; the tanh
    # approximation is used here (|delta| <= ~1e-3) since tanh maps to the EUP
    # slot on all TPU generations.
    h = jax.nn.gelu(h, approximate=True)

    # dense_2 chunk, accumulated in f32.
    acc_ref[...] += jnp.dot(h.astype(w2_ref.dtype), w2_ref[...],
                            preferred_element_type=jnp.float32)

    @pl.when(j == pl.num_programs(1) - 1)
    def _():
        o_ref[...] = (acc_ref[...] + b2_ref[...]).astype(o_ref.dtype)


def prepare_mlp_params(w1, b1, w2, b2, *, compute_dtype=jnp.bfloat16):
    """One-time weight preparation (hoisted out of the forward hot path).

    w1: (mlp_dim, hidden_dim)  b1: (mlp_dim,)     -- PyTorch nn.Linear layout
    w2: (hidden_dim, mlp_dim)  b2: (hidden_dim,)
    Returns padded, transposed, compute-dtype weights + f32 biases.
    """
    M, H = w1.shape
    assert b1.shape == (M,) and w2.shape == (H, M) and b2.shape == (H,)
    Hp = _round_up(H, 128)
    Mp = _round_up(M, 128)

    w1t = jnp.transpose(w1).astype(compute_dtype)   # (H, M)
    w2t = jnp.transpose(w2).astype(compute_dtype)   # (M, H)
    if (Hp, Mp) != (H, M):
        w1t = jnp.pad(w1t, ((0, Hp - H), (0, Mp - M)))
        w2t = jnp.pad(w2t, ((0, Mp - M), (0, Hp - H)))
    b1p = jnp.pad(b1.astype(jnp.float32), (0, Mp - M)).reshape(1, Mp)
    b2p = jnp.pad(b2.astype(jnp.float32), (0, Hp - H)).reshape(1, Hp)
    return w1t, b1p, w2t, b2p


def mlp_block_forward(x, params, *, row_tile=512, mlp_tile=512, out_dtype=None):
    """MlpBlock forward.  x: (..., hidden_dim) -> (..., hidden_dim)."""
    w1_p, b1_p, w2_p, b2_p = params
    Hp, Mp = w1_p.shape
    cdt = w1_p.dtype
    out_dtype = out_dtype if out_dtype is not None else x.dtype

    lead = x.shape[:-1]
    H = x.shape[-1]
    assert H <= Hp
    rows = int(math.prod(lead))
    x2d = x.reshape(rows, H)

    # Pad feature dim to 128 lanes only if needed (skipped for aligned H);
    # rows are NOT padded -- the ragged last row tile is handled by Pallas.
    if H != Hp:
        x2d = jnp.pad(x2d, ((0, 0), (0, Hp - H)))
    x2d = x2d.astype(cdt)

    # Tile sizes: 8-aligned row tile, 128-aligned mlp chunk that divides Mp.
    tm = min(row_tile, _round_up(rows, 8))
    tmlp = min(mlp_tile, Mp)
    while Mp % tmlp != 0:
        tmlp -= 128

    grid = (pl.cdiv(rows, tm), Mp // tmlp)

    # Size the scoped VMEM limit to the actual working set (double-buffered
    # streamed blocks + accumulator + intermediate), with headroom.
    bc = jnp.dtype(cdt).itemsize
    bo = jnp.dtype(out_dtype).itemsize
    working = (2 * tm * Hp * bc            # x tile (double-buffered)
               + 2 * Hp * tmlp * bc        # w1 chunk
               + 2 * tmlp * Hp * bc        # w2 chunk
               + 2 * tmlp * 4 + 2 * Hp * 4  # biases
               + 2 * tm * Hp * bo          # out tile
               + tm * Hp * 4               # f32 accumulator scratch
               + tm * tmlp * 4)            # live GELU intermediate
    vmem_limit = int(1.5 * working) + (2 << 20)
    vmem_limit = max(32 << 20, min(64 << 20, vmem_limit))

    out2d = pl.pallas_call(
        _mlp_block_kernel,
        out_shape=jax.ShapeDtypeStruct((rows, Hp), out_dtype),
        grid_spec=pltpu.PrefetchScalarGridSpec(
            num_scalar_prefetch=0,
            grid=grid,
            in_specs=[
                pl.BlockSpec((tm, Hp), lambda i, j: (i, 0)),     # x row tile
                pl.BlockSpec((Hp, tmlp), lambda i, j: (0, j)),   # w1 chunk
                pl.BlockSpec((1, tmlp), lambda i, j: (0, j)),    # b1 chunk
                pl.BlockSpec((tmlp, Hp), lambda i, j: (j, 0)),   # w2 chunk
                pl.BlockSpec((1, Hp), lambda i, j: (0, 0)),      # b2
            ],
            out_specs=pl.BlockSpec((tm, Hp), lambda i, j: (i, 0)),
            scratch_shapes=[pltpu.VMEM((tm, Hp), jnp.float32)],
        ),
        compiler_params=pltpu.CompilerParams(
            dimension_semantics=("parallel", "arbitrary"),
            vmem_limit_bytes=vmem_limit,
        ),
    )(x2d, w1_p, b1_p, w2_p, b2_p)

    return out2d[:, :H].reshape(*lead, H)


def _reference_forward(x, w1, b1, w2, b2, compute_dtype=jnp.float32):
    """Pure-JAX reference mirroring the kernel's compute path (tanh GELU)."""
    cdt = compute_dtype
    h = jnp.dot(x.astype(cdt), w1.T.astype(cdt),
                preferred_element_type=jnp.float32) + b1.astype(jnp.float32)
    h = jax.nn.gelu(h, approximate=True)
    y = jnp.dot(h.astype(cdt), w2.T.astype(cdt),
                preferred_element_type=jnp.float32) + b2.astype(jnp.float32)
    return y.astype(x.dtype)


def init_params(key, hidden_dim, mlp_dim):
    """Deterministic init mirroring nn.Linear defaults (U(-1/sqrt(fan_in), ...))."""
    k1, k2, k3, k4 = jax.random.split(key, 4)

    def linear_init(kw, kb, fan_in, fan_out):
        bound = 1.0 / math.sqrt(fan_in)
        w = jax.random.uniform(kw, (fan_out, fan_in), minval=-bound, maxval=bound,
                               dtype=jnp.float32)
        b = jax.random.uniform(kb, (fan_out,), minval=-bound, maxval=bound,
                               dtype=jnp.float32)
        return w, b

    w1, b1 = linear_init(k1, k2, hidden_dim, mlp_dim)
    w2, b2 = linear_init(k3, k4, mlp_dim, hidden_dim)
    return w1, b1, w2, b2


if __name__ == "__main__":
    key = jax.random.PRNGKey(0)
    k_x, k_p = jax.random.split(key)

    B, S, hidden_dim, mlp_dim = 2, 8, 32, 64
    x = jax.random.normal(k_x, (B, S, hidden_dim), dtype=jnp.float32)
    w1, b1, w2, b2 = init_params(k_p, hidden_dim, mlp_dim)

    # --- default (bf16 compute, f32 accumulation) path -----------------------
    params_bf16 = prepare_mlp_params(w1, b1, w2, b2)  # compute_dtype=bf16 default
    fwd = jax.jit(partial(mlp_block_forward, row_tile=512, mlp_tile=512))
    out_bf16 = jax.block_until_ready(fwd(x, params_bf16))
    assert out_bf16.shape == (B, S, hidden_dim)

    ref_bf16 = _reference_forward(x, w1, b1, w2, b2, compute_dtype=jnp.bfloat16)
    ref_f32 = _reference_forward(x, w1, b1, w2, b2, compute_dtype=jnp.float32)
    err_vs_mirror = float(jnp.max(jnp.abs(out_bf16 - ref_bf16)))
    err_vs_exact = float(jnp.max(jnp.abs(out_bf16 - ref_f32)))
    assert jnp.allclose(out_bf16, ref_bf16, atol=2e-3, rtol=2e-3), err_vs_mirror
    assert jnp.allclose(out_bf16, ref_f32, atol=5e-2, rtol=5e-2), err_vs_exact

    # --- f32 compute path (tight check against the f32 reference) ------------
    params_f32 = prepare_mlp_params(w1, b1, w2, b2, compute_dtype=jnp.float32)
    out_f32 = jax.block_until_ready(mlp_block_forward(x, params_f32))
    err_f32 = float(jnp.max(jnp.abs(out_f32 - ref_f32)))
    assert jnp.allclose(out_f32, ref_f32, atol=2e-3, rtol=2e-3), err_f32

    print("KERNEL_OK")
</pallas_src>

<mosaic_0001>
module attributes {stable_mosaic.version = 11 : i64} {
  func.func @_mlp_block_kernel(%arg0: i32, %arg1: i32, %arg2: memref<16x128xbf16, #tpu.memory_space<vmem>>, %arg3: memref<128x128xbf16, #tpu.memory_space<vmem>>, %arg4: memref<1x128xf32, #tpu.memory_space<vmem>>, %arg5: memref<128x128xbf16, #tpu.memory_space<vmem>>, %arg6: memref<1x128xf32, #tpu.memory_space<vmem>>, %arg7: memref<16x128xf32, #tpu.memory_space<vmem>>, %arg8: memref<16x128xf32, #tpu.memory_space<vmem>>) attributes {dimension_semantics = [#tpu.dimension_semantics<parallel>, #tpu.dimension_semantics<arbitrary>], iteration_bounds = array<i64: 1, 1>, scalar_prefetch = 0 : i64, scratch_operands = 1 : i64, tpu.core_type = #tpu.core_type<tc>, window_params = [{transform_indices = @transform_0, window_bounds = array<i64: 16, 128>}, {transform_indices = @transform_1, window_bounds = array<i64: 128, 128>}, {transform_indices = @transform_2, window_bounds = array<i64: 1, 128>}, {transform_indices = @transform_3, window_bounds = array<i64: 128, 128>}, {pipeline_mode = #tpu.pipeline_mode<synchronous>, transform_indices = @transform_4, window_bounds = array<i64: 1, 128>}, {transform_indices = @transform_5, window_bounds = array<i64: 16, 128>}]} {
    %c0_i32 = arith.constant 0 : i32
    %0 = arith.cmpi eq, %arg1, %c0_i32 : i32
    %1 = arith.extui %0 : i1 to i32
    %c0_i32_0 = arith.constant 0 : i32
    %2 = arith.cmpi ne, %1, %c0_i32_0 : i32
    scf.if %2 {
      %cst_19 = arith.constant 0.000000e+00 : f32
      %31 = vector.broadcast %cst_19 : f32 to vector<16x128xf32>
      %c0_20 = arith.constant 0 : index
      %c0_21 = arith.constant 0 : index
      %32 = vector.load %arg8[%c0_20, %c0_21] : memref<16x128xf32, #tpu.memory_space<vmem>>, vector<16x128xf32>
      tpu.vector_store %arg8[%c0_20, %c0_21], %31 {strides = array<i32>} : memref<16x128xf32, #tpu.memory_space<vmem>>, vector<16x128xf32>,
    } else {
    }
    %c0 = arith.constant 0 : index
    %c0_1 = arith.constant 0 : index
    %3 = vector.load %arg2[%c0, %c0_1] : memref<16x128xbf16, #tpu.memory_space<vmem>>, vector<16x128xbf16>
    %c0_2 = arith.constant 0 : index
    %c0_3 = arith.constant 0 : index
    %4 = vector.load %arg3[%c0_2, %c0_3] : memref<128x128xbf16, #tpu.memory_space<vmem>>, vector<128x128xbf16>
    %cst = arith.constant dense<0.000000e+00> : vector<16x128xf32>
    %5 = tpu.matmul %3, %4, %cst {dimension_numbers = #tpu.dot_dimension_numbers<[1], [0], [0], [1], [0, 0, 1, 1], [], []>} : vector<16x128xbf16>, vector<128x128xbf16>, vector<16x128xf32> -> vector<16x128xf32>
    %c0_4 = arith.constant 0 : index
    %c0_5 = arith.constant 0 : index
    %6 = vector.load %arg4[%c0_4, %c0_5] : memref<1x128xf32, #tpu.memory_space<vmem>>, vector<1x128xf32>
    %7 = vector.broadcast %6 : vector<1x128xf32> to vector<16x128xf32>
    %8 = arith.addf %5, %7 : vector<16x128xf32>
    %9 = arith.mulf %8, %8 : vector<16x128xf32>
    %10 = arith.mulf %8, %9 : vector<16x128xf32>
    %cst_6 = arith.constant 4.471500e-02 : f32
    %11 = vector.broadcast %cst_6 : f32 to vector<16x128xf32>
    %12 = arith.mulf %11, %10 : vector<16x128xf32>
    %13 = arith.addf %8, %12 : vector<16x128xf32>
    %cst_7 = arith.constant 0.797884583 : f32
    %14 = vector.broadcast %cst_7 : f32 to vector<16x128xf32>
    %15 = arith.mulf %14, %13 : vector<16x128xf32>
    %16 = math.tanh %15 : vector<16x128xf32>
    %cst_8 = arith.constant 1.000000e+00 : f32
    %17 = vector.broadcast %cst_8 : f32 to vector<16x128xf32>
    %18 = arith.addf %17, %16 : vector<16x128xf32>
    %cst_9 = arith.constant 5.000000e-01 : f32
    %19 = vector.broadcast %cst_9 : f32 to vector<16x128xf32>
    %20 = arith.mulf %19, %18 : vector<16x128xf32>
    %21 = arith.mulf %8, %20 : vector<16x128xf32>
    %c0_10 = arith.constant 0 : index
    %c0_11 = arith.constant 0 : index
    %22 = vector.load %arg8[%c0_10, %c0_11] : memref<16x128xf32, #tpu.memory_space<vmem>>, vector<16x128xf32>
    %23 = arith.truncf %21 : vector<16x128xf32> to vector<16x128xbf16>
    %c0_12 = arith.constant 0 : index
    %c0_13 = arith.constant 0 : index
    %24 = vector.load %arg5[%c0_12, %c0_13] : memref<128x128xbf16, #tpu.memory_space<vmem>>, vector<128x128xbf16>
    %cst_14 = arith.constant dense<0.000000e+00> : vector<16x128xf32>
    %25 = tpu.matmul %23, %24, %cst_14 {dimension_numbers = #tpu.dot_dimension_numbers<[1], [0], [0], [1], [0, 0, 1, 1], [], []>} : vector<16x128xbf16>, vector<128x128xbf16>, vector<16x128xf32> -> vector<16x128xf32>
    %26 = arith.addf %22, %25 : vector<16x128xf32>
    %c0_15 = arith.constant 0 : index
    %c0_16 = arith.constant 0 : index
    %27 = vector.load %arg8[%c0_15, %c0_16] : memref<16x128xf32, #tpu.memory_space<vmem>>, vector<16x128xf32>
    tpu.vector_store %arg8[%c0_15, %c0_16], %26 {strides = array<i32>} : memref<16x128xf32, #tpu.memory_space<vmem>>, vector<16x128xf32>,
    %c0_i32_17 = arith.constant 0 : i32
    %28 = arith.cmpi eq, %arg1, %c0_i32_17 : i32
    %29 = arith.extui %28 : i1 to i32
    %c0_i32_18 = arith.constant 0 : i32
    %30 = arith.cmpi ne, %29, %c0_i32_18 : i32
    scf.if %30 {
      %c0_19 = arith.constant 0 : index
      %c0_20 = arith.constant 0 : index
      %31 = vector.load %arg8[%c0_19, %c0_20] : memref<16x128xf32, #tpu.memory_space<vmem>>, vector<16x128xf32>
      %c0_21 = arith.constant 0 : index
      %c0_22 = arith.constant 0 : index
      %32 = vector.load %arg6[%c0_21, %c0_22] : memref<1x128xf32, #tpu.memory_space<vmem>>, vector<1x128xf32>
      %33 = vector.broadcast %32 : vector<1x128xf32> to vector<16x128xf32>
      %34 = arith.addf %31, %33 : vector<16x128xf32>
      %c0_23 = arith.constant 0 : index
      %c0_24 = arith.constant 0 : index
      %35 = vector.load %arg7[%c0_23, %c0_24] : memref<16x128xf32, #tpu.memory_space<vmem>>, vector<16x128xf32>
      tpu.vector_store %arg7[%c0_23, %c0_24], %34 {strides = array<i32>} : memref<16x128xf32, #tpu.memory_space<vmem>>, vector<16x128xf32>,
    } else {
    }
    return
  }
  func.func @transform_0(%arg0: i32, %arg1: i32) -> (i32, i32) {
    %c0_i32 = arith.constant 0 : i32
    %c0_i32_0 = arith.constant 0 : i32
    return %arg0, %c0_i32 : i32, i32
  }
  func.func @transform_1(%arg0: i32, %arg1: i32) -> (i32, i32) {
    %c0_i32 = arith.constant 0 : i32
    %c0_i32_0 = arith.constant 0 : i32
    return %c0_i32, %arg1 : i32, i32
  }
  func.func @transform_2(%arg0: i32, %arg1: i32) -> (i32, i32) {
    %c0_i32 = arith.constant 0 : i32
    %c0_i32_0 = arith.constant 0 : i32
    return %c0_i32, %arg1 : i32, i32
  }
  func.func @transform_3(%arg0: i32, %arg1: i32) -> (i32, i32) {
    %c0_i32 = arith.constant 0 : i32
    %c0_i32_0 = arith.constant 0 : i32
    return %arg1, %c0_i32 : i32, i32
  }
  func.func @transform_4(%arg0: i32, %arg1: i32) -> (i32, i32) {
    %c0_i32 = arith.constant 0 : i32
    %c0_i32_0 = arith.constant 0 : i32
    %c0_i32_1 = arith.constant 0 : i32
    return %c0_i32, %c0_i32_0 : i32, i32
  }
  func.func @transform_5(%arg0: i32, %arg1: i32) -> (i32, i32) {
    %c0_i32 = arith.constant 0 : i32
    %c0_i32_0 = arith.constant 0 : i32
    return %arg0, %c0_i32 : i32, i32
  }
}

</mosaic_0001>

<llo_original>
// kernel: mlp_block_forward.1
$region0: #{mlp_block_forward.1}
  #allocation0 [shape = 'u32[]', space=smem, size = 0x4, offset = 0x4, fixed_abs, tag = 'smem constant byte address 0x4 - core index']
  #allocation1 [shape = 'u32[144,128]{1,0:T(1,128)}', space=vmem, size = 0x12000, scoped, tag = 'internal scratch']
  #allocation2 [shape = 'f32[16,128]{1,0:T(8,128)}', space=vmem, size = 0x2000, scoped, tag = 'scratch operand']
  %s0 = inlined_call_operand.vmem [shape: bf16[16,128], index: 0, kind: input, shape index: {}]
  %s1 = inlined_call_operand.hbm [shape: bf16[128,128], index: 1, kind: input, shape index: {}]
  %s2 = inlined_call_operand.vmem [shape: f32[1,128], index: 2, kind: input, shape index: {}]
  %s3 = inlined_call_operand.hbm [shape: bf16[128,128], index: 3, kind: input, shape index: {}]
  %s4 = inlined_call_operand.vmem [shape: f32[1,128], index: 4, kind: input, shape index: {}]
  %s5 = inlined_call_operand.vmem [shape: f32[16,128], index: 5, kind: output, shape index: {}]
  %s6 = sld [smem:[#allocation0]]
  $region46: #{mlp_block_forward.1} parent=0
    _
  %s8 = ssub.s32 1, %s6
  %s9 = scalar_select 0, %s8, %s6
  $region1: #{mlp_block_forward.1} parent=0
    #allocation3 [shape = 'u8[32768]{0}', space=vmem, size = 0x8000, scoped, tag = 'input window, operand 1, single buffered']
    #allocation4 [shape = 's32[1]{0}', space=sflag, size = 0x4, scoped, tag = 'scoped memory for mlp_block_forward.1']
    #allocation5 [shape = 'u8[32768]{0}', space=vmem, size = 0x8000, scoped, tag = 'input window, operand 3, single buffered']
    #allocation6 [shape = 's32[1]{0}', space=sflag, size = 0x4, scoped, tag = 'scoped memory for mlp_block_forward.1']
    %10 = vsyncpa [#allocation4], 0
    %11 = vsyncpa [#allocation6], 0
    // Predicated region
    $region2: #{mlp_block_forward.1} parent=1 // pred_check
      _
    $region3: #{mlp_block_forward.1} parent=1 // pred_check_branch
      %13 = sbr.rel (0) target = $region5
    $region4: #{mlp_block_forward.1} parent=1 // pred_region
      _
    $region5: #{mlp_block_forward.1} parent=1 // pred_fallthru
      _
    // Predicated region
    $region6: #{mlp_block_forward.1} parent=1 // pred_check
      _
    $region7: #{mlp_block_forward.1} parent=1 // pred_check_branch
      %15 = sbr.rel (0) target = $region9
    $region8: #{mlp_block_forward.1} parent=1 // pred_region
      %s17 = ssub.s32 1024, 1024
      %18 = vsyncadd [#allocation4], %s17
      %s19 = sshll.u32 [#allocation3], 4
      %s20 = int_to_ptr.vmem [resolvable:$true] %s19
      %25 = dma.hbm_to_vmem [thread:$0]  %s1, 1024, %s20, [#allocation4], 64, 64, 4
    $region9: #{mlp_block_forward.1} parent=1 // pred_fallthru
      _
    // Predicated region
    $region10: #{mlp_block_forward.1} parent=1 // pred_check
      _
    $region11: #{mlp_block_forward.1} parent=1 // pred_check_branch
      %27 = sbr.rel (0) target = $region13
    $region12: #{mlp_block_forward.1} parent=1 // pred_region
      _
    $region13: #{mlp_block_forward.1} parent=1 // pred_fallthru
      _
    // Predicated region
    $region14: #{mlp_block_forward.1} parent=1 // pred_check
      _
    $region15: #{mlp_block_forward.1} parent=1 // pred_check_branch
      %29 = sbr.rel (0) target = $region17
    $region16: #{mlp_block_forward.1} parent=1 // pred_region
      %s31 = ssub.s32 1024, 1024
      %32 = vsyncadd [#allocation6], %s31
      %s33 = sshll.u32 [#allocation5], 4
      %s34 = int_to_ptr.vmem [resolvable:$true] %s33
      %39 = dma.hbm_to_vmem [thread:$0]  %s3, 1024, %s34, [#allocation6], 64, 64, 4
    $region17: #{mlp_block_forward.1} parent=1 // pred_fallthru
      _
    // Predicated region
    $region18: #{mlp_block_forward.1} parent=1 // pred_check
      _
    $region19: #{mlp_block_forward.1} parent=1 // pred_check_branch
      %41 = sbr.rel (0) target = $region21
    $region20: #{mlp_block_forward.1} parent=1 // pred_region
      _
    $region21: #{mlp_block_forward.1} parent=1 // pred_fallthru
      _
    // Predicated region
    $region22: #{mlp_block_forward.1} parent=1 // pred_check
      _
    $region23: #{mlp_block_forward.1} parent=1 // pred_check_branch
      %43 = sbr.rel (0) target = $region25
    $region24: #{mlp_block_forward.1} parent=1 // pred_region
      %44 = dma.done [#allocation4], 1024
    $region25: #{mlp_block_forward.1} parent=1 // pred_fallthru
      _
    // Predicated region
    $region26: #{mlp_block_forward.1} parent=1 // pred_check
      _
    $region27: #{mlp_block_forward.1} parent=1 // pred_check_branch
      %46 = sbr.rel (0) target = $region29
    $region28: #{mlp_block_forward.1} parent=1 // pred_region
      %47 = dma.done [#allocation6], 1024
    $region29: #{mlp_block_forward.1} parent=1 // pred_fallthru
      _
    %p49 = scmp.eq.s32.totalorder 0, 0
    // Predicated region
    $region30: #{mlp_block_forward.1} parent=1 // pred_check
      %p50 = pneg %p49
    $region31: #{mlp_block_forward.1} parent=1 // pred_check_branch
      %52 = sbr.rel (%p50) target = $region33
    $region32: #{mlp_block_forward.1} parent=1 // pred_region
      %53 = vst [vmem:[#allocation2] sm:$0xff] 0.0
      %54 = vst [vmem:[#allocation2 + $0x8] sm:$0xff] 0.0
    $region33: #{mlp_block_forward.1} parent=1 // pred_fallthru
      _
    %v55 = vld [vmem:[%s0] sm:$0xf]
    %v56 = vld [vmem:[%s0 + $0x4] sm:$0xf]
    %v57 = vld [vmem:[#allocation3] sm:$0xf]
    %v58 = vld [vmem:[#allocation3 + $0x4] sm:$0xf]
    %v59 = vld [vmem:[#allocation3 + $0x8] sm:$0xf]
    %v60 = vld [vmem:[#allocation3 + $0xc] sm:$0xf]
    %v61 = vld [vmem:[#allocation3 + $0x10] sm:$0xf]
    %v62 = vld [vmem:[#allocation3 + $0x14] sm:$0xf]
    %v63 = vld [vmem:[#allocation3 + $0x18] sm:$0xf]
    %v64 = vld [vmem:[#allocation3 + $0x1c] sm:$0xf]
    %v65 = vld [vmem:[#allocation3 + $0x20] sm:$0xf]
    %v66 = vld [vmem:[#allocation3 + $0x24] sm:$0xf]
    %v67 = vld [vmem:[#allocation3 + $0x28] sm:$0xf]
    %v68 = vld [vmem:[#allocation3 + $0x2c] sm:$0xf]
    %v69 = vld [vmem:[#allocation3 + $0x30] sm:$0xf]
    %v70 = vld [vmem:[#allocation3 + $0x34] sm:$0xf]
    %v71 = vld [vmem:[#allocation3 + $0x38] sm:$0xf]
    %v72 = vld [vmem:[#allocation3 + $0x3c] sm:$0xf]
    %v73 = vld [vmem:[%s2] sm:$0x1]
    %v75 = vlaneseq
    %v76 = vshrl.u32 %v75, 7
    %v77 = vsub.s32 0, %v76
    %v78 = vrot.slane %v73, %v77
    %v82 = vunpack.c.l.b16 %v55
    %v83 = vunpack.c.l.b16 %v56
    %v84 = vpack.c.b16 %v83, %v82
    %v102 = vunpack.c.l.b16 %v57
    %v103 = vunpack.c.l.b16 %v58
    %v104 = vunpack.c.l.b16 %v59
    %v105 = vunpack.c.l.b16 %v60
    %v106 = vunpack.c.l.b16 %v61
    %v107 = vunpack.c.l.b16 %v62
    %v108 = vunpack.c.l.b16 %v63
    %v109 = vunpack.c.l.b16 %v64
    %v110 = vunpack.c.l.b16 %v65
    %v111 = vunpack.c.l.b16 %v66
    %v112 = vunpack.c.l.b16 %v67
    %v113 = vunpack.c.l.b16 %v68
    %v114 = vunpack.c.l.b16 %v69
    %v115 = vunpack.c.l.b16 %v70
    %v116 = vunpack.c.l.b16 %v71
    %v117 = vunpack.c.l.b16 %v72
    %v118 = vpack.c.b16 %v103, %v102
    %v119 = vpack.c.b16 %v105, %v104
    %v120 = vpack.c.b16 %v107, %v106
    %v121 = vpack.c.b16 %v109, %v108
    %v122 = vpack.c.b16 %v111, %v110
    %v123 = vpack.c.b16 %v113, %v112
    %v124 = vpack.c.b16 %v115, %v114
    %v125 = vpack.c.b16 %v117, %v116
    %134 = vmatprep.subr.bf16.mxu0 0
    %135 = vmatpush1.bf16.msra.mxu0 %v125
    %136 = vmatprep.subr.bf16.mxu0 0
    %137 = vmatpush1.bf16.msra.mxu0 %v124
    %138 = vmatprep.subr.bf16.mxu0 0
    %139 = vmatpush1.bf16.msra.mxu0 %v123
    %140 = vmatprep.subr.bf16.mxu0 0
    %141 = vmatpush1.bf16.msra.mxu0 %v122
    %142 = vmatprep.subr.bf16.mxu0 0
    %143 = vmatpush1.bf16.msra.mxu0 %v121
    %144 = vmatprep.subr.bf16.mxu0 0
    %145 = vmatpush1.bf16.msra.mxu0 %v120
    %146 = vmatprep.subr.bf16.mxu0 0
    %147 = vmatpush1.bf16.msra.mxu0 %v119
    %148 = vmatprep.subr.bf16.mxu0 0
    %149 = vmatpush1.bf16.msra.mxu0 %v118
    %150 = vmatprep.subr.bf16.mxu0 0
    %151 = vmatpush2.bf16.msra.mxu0 0
    %152 = vmatprep.subr.bf16.mxu0 0
    %153 = vmatpush2.bf16.msra.mxu0 0
    %154 = vmatprep.subr.bf16.mxu0 0
    %155 = vmatpush2.bf16.msra.mxu0 0
    %156 = vmatprep.subr.bf16.mxu0 0
    %157 = vmatpush2.bf16.msra.mxu0 0
    %158 = vmatprep.subr.bf16.mxu0 0
    %159 = vmatpush2.bf16.msra.mxu0 0
    %160 = vmatprep.subr.bf16.mxu0 0
    %161 = vmatpush2.bf16.msra.mxu0 0
    %162 = vmatprep.subr.bf16.mxu0 0
    %163 = vmatpush2.bf16.msra.mxu0 0
    %164 = vmatprep.subr.bf16.mxu0 0
    %165 = vmatpush2.bf16.msra.mxu0 0
    %166 = vmatprep.mubr.bf16.mxu0 0
    %167 = vmatmul.mubr.bf16.gmra.mxu0 %v84
    %v168 = vpop.f32.mrf.mxu0
    %v169 = vadd.f32 %v78, %v168
    %v170 = vpop.f32.mrf.mxu0
    %v171 = vpop.f32.mrf.mxu0
    %v172 = vadd.f32 %v78, %v171
    %v173 = vpop.f32.mrf.mxu0
    %174 = vdwg.mxu0
    %v175 = vmul.f32 %v169, %v169
    %v176 = vmul.f32 %v172, %v172
    %v177 = vmul.f32 %v169, %v175
    %v178 = vmul.f32 %v172, %v176
    %v179 = vmul.f32 %v177, 0.044715
    %v180 = vmul.f32 %v178, 0.044715
    %v181 = vadd.f32 %v169, %v179
    %v182 = vadd.f32 %v172, %v180
    %v183 = vmul.f32 %v181, 0.7978846
    %v184 = vmul.f32 %v182, 0.7978846
    %v185 = vtanh.pop %v183
    %v186 = vtanh.pop %v184
    %v187 = vadd.f32 %v185, 1.0
    %v188 = vadd.f32 %v186, 1.0
    %v189 = vmul.f32 %v187, 0.5
    %v190 = vmul.f32 %v188, 0.5
    %v191 = vmul.f32 %v169, %v189
    %v192 = vmul.f32 %v172, %v190
    %v193 = vld [vmem:[#allocation2] sm:$0xff]
    %v194 = vld [vmem:[#allocation2 + $0x8] sm:$0xff]
    %v195 = vpack.c.bf16 %v192, %v191
    %v196 = vld [vmem:[#allocation5] sm:$0xf]
    %v197 = vld [vmem:[#allocation5 + $0x4] sm:$0xf]
    %v198 = vld [vmem:[#allocation5 + $0x8] sm:$0xf]
    %v199 = vld [vmem:[#allocation5 + $0xc] sm:$0xf]
    %v200 = vld [vmem:[#allocation5 + $0x10] sm:$0xf]
    %v201 = vld [vmem:[#allocation5 + $0x14] sm:$0xf]
    %v202 = vld [vmem:[#allocation5 + $0x18] sm:$0xf]
    %v203 = vld [vmem:[#allocation5 + $0x1c] sm:$0xf]
    %v204 = vld [vmem:[#allocation5 + $0x20] sm:$0xf]
    %v205 = vld [vmem:[#allocation5 + $0x24] sm:$0xf]
    %v206 = vld [vmem:[#allocation5 + $0x28] sm:$0xf]
    %v207 = vld [vmem:[#allocation5 + $0x2c] sm:$0xf]
    %v208 = vld [vmem:[#allocation5 + $0x30] sm:$0xf]
    %v209 = vld [vmem:[#allocation5 + $0x34] sm:$0xf]
    %v210 = vld [vmem:[#allocation5 + $0x38] sm:$0xf]
    %v211 = vld [vmem:[#allocation5 + $0x3c] sm:$0xf]
    %v228 = vunpack.c.l.b16 %v196
    %v229 = vunpack.c.l.b16 %v197
    %v230 = vunpack.c.l.b16 %v198
    %v231 = vunpack.c.l.b16 %v199
    %v232 = vunpack.c.l.b16 %v200
    %v233 = vunpack.c.l.b16 %v201
    %v234 = vunpack.c.l.b16 %v202
    %v235 = vunpack.c.l.b16 %v203
    %v236 = vunpack.c.l.b16 %v204
    %v237 = vunpack.c.l.b16 %v205
    %v238 = vunpack.c.l.b16 %v206
    %v239 = vunpack.c.l.b16 %v207
    %v240 = vunpack.c.l.b16 %v208
    %v241 = vunpack.c.l.b16 %v209
    %v242 = vunpack.c.l.b16 %v210
    %v243 = vunpack.c.l.b16 %v211
    %v244 = vpack.c.b16 %v229, %v228
    %v245 = vpack.c.b16 %v231, %v230
    %v246 = vpack.c.b16 %v233, %v232
    %v247 = vpack.c.b16 %v235, %v234
    %v248 = vpack.c.b16 %v237, %v236
    %v249 = vpack.c.b16 %v239, %v238
    %v250 = vpack.c.b16 %v241, %v240
    %v251 = vpack.c.b16 %v243, %v242
    %260 = vmatprep.subr.bf16.mxu0 0
    %261 = vmatpush1.bf16.msra.mxu0 %v251
    %262 = vmatprep.subr.bf16.mxu0 0
    %263 = vmatpush1.bf16.msra.mxu0 %v250
    %264 = vmatprep.subr.bf16.mxu0 0
    %265 = vmatpush1.bf16.msra.mxu0 %v249
    %266 = vmatprep.subr.bf16.mxu0 0
    %267 = vmatpush1.bf16.msra.mxu0 %v248
    %268 = vmatprep.subr.bf16.mxu0 0
    %269 = vmatpush1.bf16.msra.mxu0 %v247
    %270 = vmatprep.subr.bf16.mxu0 0
    %271 = vmatpush1.bf16.msra.mxu0 %v246
    %272 = vmatprep.subr.bf16.mxu0 0
    %273 = vmatpush1.bf16.msra.mxu0 %v245
    %274 = vmatprep.subr.bf16.mxu0 0
    %275 = vmatpush1.bf16.msra.mxu0 %v244
    %276 = vmatprep.subr.bf16.mxu0 0
    %277 = vmatpush2.bf16.msra.mxu0 0
    %278 = vmatprep.subr.bf16.mxu0 0
    %279 = vmatpush2.bf16.msra.mxu0 0
    %280 = vmatprep.subr.bf16.mxu0 0
    %281 = vmatpush2.bf16.msra.mxu0 0
    %282 = vmatprep.subr.bf16.mxu0 0
    %283 = vmatpush2.bf16.msra.mxu0 0
    %284 = vmatprep.subr.bf16.mxu0 0
    %285 = vmatpush2.bf16.msra.mxu0 0
    %286 = vmatprep.subr.bf16.mxu0 0
    %287 = vmatpush2.bf16.msra.mxu0 0
    %288 = vmatprep.subr.bf16.mxu0 0
    %289 = vmatpush2.bf16.msra.mxu0 0
    %290 = vmatprep.subr.bf16.mxu0 0
    %291 = vmatpush2.bf16.msra.mxu0 0
    %292 = vmatprep.mubr.bf16.mxu0 0
    %293 = vmatmul.mubr.bf16.gmra.mxu0 %v195
    %v294 = vpop.f32.mrf.mxu0
    %v295 = vadd.f32 0.0, %v294
    %v296 = vpop.f32.mrf.mxu0
    %v297 = vpop.f32.mrf.mxu0
    %v298 = vadd.f32 0.0, %v297
    %v299 = vpop.f32.mrf.mxu0
    %300 = vdwg.mxu0
    %v301 = vadd.f32 %v193, %v295
    %v302 = vadd.f32 %v194, %v298
    %303 = vst [vmem:[#allocation2] sm:$0xff] %v301
    %304 = vst [vmem:[#allocation2 + $0x8] sm:$0xff] %v302
    // Predicated region
    $region34: #{mlp_block_forward.1} parent=1 // pred_check
      %p305 = pneg %p49
    $region35: #{mlp_block_forward.1} parent=1 // pred_check_branch
      %307 = sbr.rel (%p305) target = $region37
    $region36: #{mlp_block_forward.1} parent=1 // pred_region
      %v308 = vld [vmem:[#allocation2] sm:$0xff]
      %v309 = vld [vmem:[#allocation2 + $0x8] sm:$0xff]
      %v310 = vld [vmem:[%s4] sm:$0x1]
      %v312 = vlaneseq
      %v313 = vshrl.u32 %v312, 7
      %v314 = vsub.s32 0, %v313
      %v315 = vrot.slane %v310, %v314
      %v317 = vadd.f32 %v308, %v315
      %v318 = vadd.f32 %v309, %v315
      %319 = vst [vmem:[%s5] sm:$0xff] %v317
      %320 = vst [vmem:[%s5 + $0x8] sm:$0xff] %v318
    $region37: #{mlp_block_forward.1} parent=1 // pred_fallthru
      _
    // Predicated region
    $region38: #{mlp_block_forward.1} parent=1 // pred_check
      _
    $region39: #{mlp_block_forward.1} parent=1 // pred_check_branch
      %322 = sbr.rel (0) target = $region41
    $region40: #{mlp_block_forward.1} parent=1 // pred_region
      _
    $region41: #{mlp_block_forward.1} parent=1 // pred_fallthru
      _
    // Predicated region
    $region42: #{mlp_block_forward.1} parent=1 // pred_check
      _
    $region43: #{mlp_block_forward.1} parent=1 // pred_check_branch
      %324 = sbr.rel (0) target = $region45
    $region44: #{mlp_block_forward.1} parent=1 // pred_region
      _
    $region45: #{mlp_block_forward.1} parent=1 // pred_fallthru
      _
    %325 = vsyncpa [#allocation4], 1
    %326 = vsyncpa [#allocation6], 1

</llo_original>
